<compile_context>
chip_gen: v6e
topology: v6e:2x2x1
jax: 0.10.0
libtpu: 0.0.40
codegen_flags: <defaults>
</compile_context>

<pallas_src>
import jax
import jax.numpy as jnp
from jax.experimental import pallas as pl
from jax.experimental.pallas import tpu as pltpu

IMAGE_SIZE = 784
H0, H1, OUT = 100, 50, 10
H0P, H1P, OUTP = 128, 128, 128          # lane-padded (128-multiple) widths
_NEG = -1e30                            # bias fill for padded logit columns


def mlp_kernel(x_ref, w0_ref, b0_ref, w1_ref, b1_ref, w2_ref, b2_ref, o_ref):
    # fc0 + relu: bf16 MXU matmul, f32 accumulate.  The bf16 cast of x happens here
    # (VPU slots are idle while the kernel is HBM/MXU bound) instead of as a separate
    # wrapper-side HBM pass over x.
    x = x_ref[...].astype(jnp.bfloat16)
    h0 = jnp.dot(x, w0_ref[...], preferred_element_type=jnp.float32)
    h0 = jnp.maximum(h0 + b0_ref[...], 0.0)
    # fc1 + relu and fc2 stay in f32: 128x128 matmuls are negligible vs HBM streaming,
    # and skipping the bf16 round-trips improves accuracy for free.
    h1 = jnp.dot(h0, w1_ref[...], preferred_element_type=jnp.float32)
    h1 = jnp.maximum(h1 + b1_ref[...], 0.0)
    logits = jnp.dot(h1, w2_ref[...], preferred_element_type=jnp.float32) + b2_ref[...]
    # Numerically stable log_softmax over the (padded) lane dim; padded columns have a
    # -1e30 bias -> exp underflows to exactly 0 and they never win the max.
    m = jnp.max(logits, axis=-1, keepdims=True)
    shifted = logits - m
    lse = jnp.log(jnp.sum(jnp.exp(shifted), axis=-1, keepdims=True))
    o_ref[...] = (shifted - lse).astype(o_ref.dtype)   # bf16 store: lane-dense, half the bytes


def _round_up(n, m):
    return ((n + m - 1) // m) * m


def prepare_params(params):
    """One-time lane-padding / casting of the weights (hoisted out of the hot path)."""
    w0, b0, w1, b1, w2, b2 = params
    w0p = jnp.pad(w0, ((0, 0), (0, H0P - H0))).astype(jnp.bfloat16)
    b0p = jnp.pad(b0.reshape(1, H0), ((0, 0), (0, H0P - H0))).astype(jnp.float32)
    w1p = jnp.pad(w1, ((0, H0P - H0), (0, H1P - H1))).astype(jnp.float32)
    b1p = jnp.pad(b1.reshape(1, H1), ((0, 0), (0, H1P - H1))).astype(jnp.float32)
    w2p = jnp.pad(w2, ((0, H1P - H1), (0, OUTP - OUT))).astype(jnp.float32)
    b2p = jnp.pad(b2.reshape(1, OUT), ((0, 0), (0, OUTP - OUT)),
                  constant_values=_NEG).astype(jnp.float32)
    return (w0p, b0p, w1p, b1p, w2p, b2p)


def _tc_per_chip():
    # v7x (and v4 / v5p megacore) expose 2 TensorCores behind one device; the
    # "parallel" batch axis can shard across them.  v5e / v6e have a single TC,
    # where extra grid steps for small B are pure overhead.
    try:
        kind = jax.devices()[0].device_kind.lower()
    except Exception:
        return 1
    if "v7" in kind or "v5p" in kind or "v4" in kind:
        return 2
    return 1


def _choose_batch_tile(B, n_tc):
    # >= n_tc grid steps so the parallel axis fills every TensorCore; otherwise as few
    # steps as possible (per-step overhead ~0.35us).  Multiple of 16 satisfies both the
    # f32 (8,128) and bf16 (16,128) block tilings; cap at 1024 rows (double-buffered
    # f32 x tile ~6.3 MB -> comfortably inside VMEM on all generations).
    tile = _round_up(pl.cdiv(B, max(1, n_tc)), 16)
    return max(16, min(1024, tile))


def neural_net_ab_forward(x, prepared_params, *, batch_tile=None):
    """x: any shape whose trailing dims flatten to IMAGE_SIZE (e.g. (B,1,28,28)).
    prepared_params: output of prepare_params()."""
    w0p, b0p, w1p, b1p, w2p, b2p = prepared_params
    x2d = x.reshape(-1, IMAGE_SIZE).astype(jnp.float32)   # no-op for f32 input
    B = x2d.shape[0]
    if batch_tile is None:
        batch_tile = _choose_batch_tile(B, _tc_per_chip())
    else:
        batch_tile = max(16, _round_up(int(batch_tile), 16))   # keep blocks tile-legal
    Bp = _round_up(B, batch_tile)
    if Bp != B:
        # Ragged final tile: zero-pad the batch (padded rows are finite, sliced off below).
        x2d = jnp.pad(x2d, ((0, Bp - B), (0, 0)))

    grid = (Bp // batch_tile,)
    rep = lambda i: (0, 0)   # weights/biases: same block every step -> VMEM-resident

    # Advisory cost hint so XLA overlaps neighbouring ops with the custom call.
    flops = 2 * Bp * (IMAGE_SIZE * H0P + H0P * H1P + H1P * OUTP)
    param_bytes = (w0p.size * 2 + w1p.size * 4 + w2p.size * 4
                   + (b0p.size + b1p.size + b2p.size) * 4)
    bytes_accessed = Bp * IMAGE_SIZE * 4 + param_bytes + Bp * OUTP * 2
    cost = pl.CostEstimate(flops=flops, transcendentals=Bp * OUTP,
                           bytes_accessed=bytes_accessed)

    # Explicit scoped-VMEM budget: double-buffered x/out tiles + resident params + slack
    # (keeps large tiles legal on v5e's ~16 MiB default; capped at v7x's 64 MiB).
    x_tile_bytes = batch_tile * IMAGE_SIZE * 4
    out_tile_bytes = batch_tile * OUTP * 2
    vmem_limit = min(2 * (x_tile_bytes + out_tile_bytes) + 2 * param_bytes + (8 << 20),
                     64 << 20)

    out = pl.pallas_call(
        mlp_kernel,
        out_shape=jax.ShapeDtypeStruct((Bp, OUTP), jnp.bfloat16),
        grid_spec=pltpu.PrefetchScalarGridSpec(
            num_scalar_prefetch=0,
            grid=grid,
            in_specs=[
                pl.BlockSpec((batch_tile, IMAGE_SIZE), lambda i: (i, 0)),
                pl.BlockSpec((IMAGE_SIZE, H0P), rep),
                pl.BlockSpec((1, H0P), rep),
                pl.BlockSpec((H0P, H1P), rep),
                pl.BlockSpec((1, H1P), rep),
                pl.BlockSpec((H1P, OUTP), rep),
                pl.BlockSpec((1, OUTP), rep),
            ],
            out_specs=pl.BlockSpec((batch_tile, OUTP), lambda i: (i, 0)),
        ),
        compiler_params=pltpu.CompilerParams(
            dimension_semantics=("parallel",),
            vmem_limit_bytes=int(vmem_limit),
        ),
        cost_estimate=cost,
    )(x2d, w0p, b0p, w1p, b1p, w2p, b2p)
    # Drop batch padding + padded logit columns; return f32 like the PyTorch module.
    return out[:B, :OUT].astype(jnp.float32)


def init_params(key):
    """Deterministic init mimicking nn.Linear default (uniform +/- 1/sqrt(fan_in))."""
    def linear(k, fan_in, fan_out):
        kw, kb = jax.random.split(k)
        bound = 1.0 / jnp.sqrt(fan_in)
        w = jax.random.uniform(kw, (fan_in, fan_out), jnp.float32, -bound, bound)
        b = jax.random.uniform(kb, (1, fan_out), jnp.float32, -bound, bound)
        return w, b

    k0, k1, k2 = jax.random.split(key, 3)
    w0, b0 = linear(k0, IMAGE_SIZE, H0)
    w1, b1 = linear(k1, H0, H1)
    w2, b2 = linear(k2, H1, OUT)
    return (w0, b0, w1, b1, w2, b2)


def reference_forward(x, params):
    w0, b0, w1, b1, w2, b2 = params
    x2d = x.reshape(-1, IMAGE_SIZE).astype(jnp.float32)
    h0 = jnp.maximum(x2d @ w0 + b0, 0.0)
    h1 = jnp.maximum(h0 @ w1 + b1, 0.0)
    logits = h1 @ w2 + b2
    return jax.nn.log_softmax(logits, axis=1)


if __name__ == "__main__":
    key = jax.random.PRNGKey(0)
    kx, kp = jax.random.split(key)
    params = init_params(kp)
    prepared = prepare_params(params)   # one-time padding/casting, reused across calls

    # Small MNIST-like batch: (B, 1, 28, 28); B=24 is not a tile multiple, which
    # exercises the ragged-batch (zero-pad) path on every chip generation.
    B = 24
    x = jax.random.normal(kx, (B, 1, 28, 28), jnp.float32)

    fwd = jax.jit(neural_net_ab_forward)
    out = jax.block_until_ready(fwd(x, prepared))

    ref = reference_forward(x, params)
    assert out.shape == (B, OUT)
    # bf16 x/w0 matmul (f32 accumulate) + bf16 output store: compare loosely vs f32 ref.
    assert jnp.allclose(out, ref, atol=2e-2, rtol=2e-2), "mismatch vs JAX reference"
    print("KERNEL_OK")
</pallas_src>

<mosaic_0001>
module attributes {stable_mosaic.version = 11 : i64} {
  func.func @mlp_kernel(%arg0: i32, %arg1: memref<32x784xf32, #tpu.memory_space<vmem>>, %arg2: memref<784x128xbf16, #tpu.memory_space<vmem>>, %arg3: memref<1x128xf32, #tpu.memory_space<vmem>>, %arg4: memref<128x128xf32, #tpu.memory_space<vmem>>, %arg5: memref<1x128xf32, #tpu.memory_space<vmem>>, %arg6: memref<128x128xf32, #tpu.memory_space<vmem>>, %arg7: memref<1x128xf32, #tpu.memory_space<vmem>>, %arg8: memref<32x128xbf16, #tpu.memory_space<vmem>>) attributes {dimension_semantics = [#tpu.dimension_semantics<parallel>], iteration_bounds = array<i64: 1>, scalar_prefetch = 0 : i64, scratch_operands = 0 : i64, tpu.core_type = #tpu.core_type<tc>, window_params = [{transform_indices = @transform_0, window_bounds = array<i64: 32, 784>}, {pipeline_mode = #tpu.pipeline_mode<synchronous>, transform_indices = @transform_1, window_bounds = array<i64: 784, 128>}, {pipeline_mode = #tpu.pipeline_mode<synchronous>, transform_indices = @transform_2, window_bounds = array<i64: 1, 128>}, {pipeline_mode = #tpu.pipeline_mode<synchronous>, transform_indices = @transform_3, window_bounds = array<i64: 128, 128>}, {pipeline_mode = #tpu.pipeline_mode<synchronous>, transform_indices = @transform_4, window_bounds = array<i64: 1, 128>}, {pipeline_mode = #tpu.pipeline_mode<synchronous>, transform_indices = @transform_5, window_bounds = array<i64: 128, 128>}, {pipeline_mode = #tpu.pipeline_mode<synchronous>, transform_indices = @transform_6, window_bounds = array<i64: 1, 128>}, {transform_indices = @transform_7, window_bounds = array<i64: 32, 128>}]} {
    %c0 = arith.constant 0 : index
    %c0_0 = arith.constant 0 : index
    %0 = vector.load %arg1[%c0, %c0_0] : memref<32x784xf32, #tpu.memory_space<vmem>>, vector<32x784xf32>
    %1 = arith.truncf %0 : vector<32x784xf32> to vector<32x784xbf16>
    %c0_1 = arith.constant 0 : index
    %c0_2 = arith.constant 0 : index
    %2 = vector.load %arg2[%c0_1, %c0_2] : memref<784x128xbf16, #tpu.memory_space<vmem>>, vector<784x128xbf16>
    %cst = arith.constant dense<0.000000e+00> : vector<32x128xf32>
    %3 = tpu.matmul %1, %2, %cst {dimension_numbers = #tpu.dot_dimension_numbers<[1], [0], [0], [1], [0, 0, 1, 1], [], []>} : vector<32x784xbf16>, vector<784x128xbf16>, vector<32x128xf32> -> vector<32x128xf32>
    %c0_3 = arith.constant 0 : index
    %c0_4 = arith.constant 0 : index
    %4 = vector.load %arg3[%c0_3, %c0_4] : memref<1x128xf32, #tpu.memory_space<vmem>>, vector<1x128xf32>
    %5 = vector.broadcast %4 : vector<1x128xf32> to vector<32x128xf32>
    %6 = arith.addf %3, %5 : vector<32x128xf32>
    %cst_5 = arith.constant 0.000000e+00 : f32
    %7 = vector.broadcast %cst_5 : f32 to vector<32x128xf32>
    %8 = arith.maximumf %6, %7 : vector<32x128xf32>
    %c0_6 = arith.constant 0 : index
    %c0_7 = arith.constant 0 : index
    %9 = vector.load %arg4[%c0_6, %c0_7] : memref<128x128xf32, #tpu.memory_space<vmem>>, vector<128x128xf32>
    %cst_8 = arith.constant dense<0.000000e+00> : vector<32x128xf32>
    %10 = tpu.matmul %8, %9, %cst_8 {dimension_numbers = #tpu.dot_dimension_numbers<[1], [0], [0], [1], [0, 0, 1, 1], [], []>} : vector<32x128xf32>, vector<128x128xf32>, vector<32x128xf32> -> vector<32x128xf32>
    %c0_9 = arith.constant 0 : index
    %c0_10 = arith.constant 0 : index
    %11 = vector.load %arg5[%c0_9, %c0_10] : memref<1x128xf32, #tpu.memory_space<vmem>>, vector<1x128xf32>
    %12 = vector.broadcast %11 : vector<1x128xf32> to vector<32x128xf32>
    %13 = arith.addf %10, %12 : vector<32x128xf32>
    %cst_11 = arith.constant 0.000000e+00 : f32
    %14 = vector.broadcast %cst_11 : f32 to vector<32x128xf32>
    %15 = arith.maximumf %13, %14 : vector<32x128xf32>
    %c0_12 = arith.constant 0 : index
    %c0_13 = arith.constant 0 : index
    %16 = vector.load %arg6[%c0_12, %c0_13] : memref<128x128xf32, #tpu.memory_space<vmem>>, vector<128x128xf32>
    %cst_14 = arith.constant dense<0.000000e+00> : vector<32x128xf32>
    %17 = tpu.matmul %15, %16, %cst_14 {dimension_numbers = #tpu.dot_dimension_numbers<[1], [0], [0], [1], [0, 0, 1, 1], [], []>} : vector<32x128xf32>, vector<128x128xf32>, vector<32x128xf32> -> vector<32x128xf32>
    %c0_15 = arith.constant 0 : index
    %c0_16 = arith.constant 0 : index
    %18 = vector.load %arg7[%c0_15, %c0_16] : memref<1x128xf32, #tpu.memory_space<vmem>>, vector<1x128xf32>
    %19 = vector.broadcast %18 : vector<1x128xf32> to vector<32x128xf32>
    %20 = arith.addf %17, %19 : vector<32x128xf32>
    %cst_17 = arith.constant dense<0xFF800000> : vector<32xf32>
    %21 = vector.multi_reduction <maximumf>, %20, %cst_17 [1] : vector<32x128xf32> to vector<32xf32>
    %22 = vector.shape_cast %21 : vector<32xf32> to vector<32x1xf32>
    %23 = vector.broadcast %22 : vector<32x1xf32> to vector<32x128xf32>
    %24 = arith.subf %20, %23 : vector<32x128xf32>
    %25 = math.exp %24 : vector<32x128xf32>
    %cst_18 = arith.constant dense<0.000000e+00> : vector<32xf32>
    %26 = vector.multi_reduction <add>, %25, %cst_18 [1] : vector<32x128xf32> to vector<32xf32>
    %27 = vector.shape_cast %26 : vector<32xf32> to vector<32x1xf32>
    %28 = math.log %27 : vector<32x1xf32>
    %29 = vector.broadcast %28 : vector<32x1xf32> to vector<32x128xf32>
    %30 = arith.subf %24, %29 : vector<32x128xf32>
    %31 = arith.truncf %30 : vector<32x128xf32> to vector<32x128xbf16>
    %c0_19 = arith.constant 0 : index
    %c0_20 = arith.constant 0 : index
    %32 = vector.load %arg8[%c0_19, %c0_20] : memref<32x128xbf16, #tpu.memory_space<vmem>>, vector<32x128xbf16>
    tpu.vector_store %arg8[%c0_19, %c0_20], %31 {strides = array<i32>} : memref<32x128xbf16, #tpu.memory_space<vmem>>, vector<32x128xbf16>,
    return
  }
  func.func @transform_0(%arg0: i32) -> (i32, i32) {
    %c0_i32 = arith.constant 0 : i32
    %c0_i32_0 = arith.constant 0 : i32
    return %arg0, %c0_i32 : i32, i32
  }
  func.func @transform_1(%arg0: i32) -> (i32, i32) {
    %c0_i32 = arith.constant 0 : i32
    %c0_i32_0 = arith.constant 0 : i32
    %c0_i32_1 = arith.constant 0 : i32
    return %c0_i32, %c0_i32_0 : i32, i32
  }
  func.func @transform_2(%arg0: i32) -> (i32, i32) {
    %c0_i32 = arith.constant 0 : i32
    %c0_i32_0 = arith.constant 0 : i32
    %c0_i32_1 = arith.constant 0 : i32
    return %c0_i32, %c0_i32_0 : i32, i32
  }
  func.func @transform_3(%arg0: i32) -> (i32, i32) {
    %c0_i32 = arith.constant 0 : i32
    %c0_i32_0 = arith.constant 0 : i32
    %c0_i32_1 = arith.constant 0 : i32
    return %c0_i32, %c0_i32_0 : i32, i32
  }
  func.func @transform_4(%arg0: i32) -> (i32, i32) {
    %c0_i32 = arith.constant 0 : i32
    %c0_i32_0 = arith.constant 0 : i32
    %c0_i32_1 = arith.constant 0 : i32
    return %c0_i32, %c0_i32_0 : i32, i32
  }
  func.func @transform_5(%arg0: i32) -> (i32, i32) {
    %c0_i32 = arith.constant 0 : i32
    %c0_i32_0 = arith.constant 0 : i32
    %c0_i32_1 = arith.constant 0 : i32
    return %c0_i32, %c0_i32_0 : i32, i32
  }
  func.func @transform_6(%arg0: i32) -> (i32, i32) {
    %c0_i32 = arith.constant 0 : i32
    %c0_i32_0 = arith.constant 0 : i32
    %c0_i32_1 = arith.constant 0 : i32
    return %c0_i32, %c0_i32_0 : i32, i32
  }
  func.func @transform_7(%arg0: i32) -> (i32, i32) {
    %c0_i32 = arith.constant 0 : i32
    %c0_i32_0 = arith.constant 0 : i32
    return %arg0, %c0_i32 : i32, i32
  }
}

</mosaic_0001>

<llo_original>
// kernel: neural_net_ab_forward.1
$region0: #{neural_net_ab_forward.1}
  #allocation0 [shape = 'u32[]', space=smem, size = 0x4, offset = 0x4, fixed_abs, tag = 'smem constant byte address 0x4 - core index']
  #allocation1 [shape = 'u32[144,128]{1,0:T(1,128)}', space=vmem, size = 0x12000, scoped, tag = 'internal scratch']
  %s0 = inlined_call_operand.vmem [shape: f32[32,784], index: 0, kind: input, shape index: {}]
  %s1 = inlined_call_operand.vmem [shape: bf16[784,128], index: 1, kind: input, shape index: {}]
  %s2 = inlined_call_operand.vmem [shape: f32[1,128], index: 2, kind: input, shape index: {}]
  %s3 = inlined_call_operand.vmem [shape: f32[128,128], index: 3, kind: input, shape index: {}]
  %s4 = inlined_call_operand.vmem [shape: f32[1,128], index: 4, kind: input, shape index: {}]
  %s5 = inlined_call_operand.vmem [shape: f32[128,128], index: 5, kind: input, shape index: {}]
  %s6 = inlined_call_operand.vmem [shape: f32[1,128], index: 6, kind: input, shape index: {}]
  %s7 = inlined_call_operand.vmem [shape: bf16[32,128], index: 7, kind: output, shape index: {}]
  %s8 = sld [smem:[#allocation0]]
  $region38: #{neural_net_ab_forward.1} parent=0
    _
  %s10 = ssub.s32 1, %s8
  %s11 = scalar_select 0, %s10, %s8
  // Predicated region
  $region2: #{neural_net_ab_forward.1} parent=0 // pred_check
    _
  $region3: #{neural_net_ab_forward.1} parent=0 // pred_check_branch
    %13 = sbr.rel (0) target = $region5
  $region4: #{neural_net_ab_forward.1} parent=0 // pred_region
    _
  $region5: #{neural_net_ab_forward.1} parent=0 // pred_fallthru
    _
  // Predicated region
  $region6: #{neural_net_ab_forward.1} parent=0 // pred_check
    _
  $region7: #{neural_net_ab_forward.1} parent=0 // pred_check_branch
    %15 = sbr.rel (0) target = $region9
  $region8: #{neural_net_ab_forward.1} parent=0 // pred_region
    _
  $region9: #{neural_net_ab_forward.1} parent=0 // pred_fallthru
    _
  // Predicated region
  $region10: #{neural_net_ab_forward.1} parent=0 // pred_check
    _
  $region11: #{neural_net_ab_forward.1} parent=0 // pred_check_branch
    %17 = sbr.rel (0) target = $region13
  $region12: #{neural_net_ab_forward.1} parent=0 // pred_region
    _
  $region13: #{neural_net_ab_forward.1} parent=0 // pred_fallthru
    _
  // Predicated region
  $region14: #{neural_net_ab_forward.1} parent=0 // pred_check
    _
  $region15: #{neural_net_ab_forward.1} parent=0 // pred_check_branch
    %19 = sbr.rel (0) target = $region17
  $region16: #{neural_net_ab_forward.1} parent=0 // pred_region
    _
  $region17: #{neural_net_ab_forward.1} parent=0 // pred_fallthru
    _
  // Predicated region
  $region18: #{neural_net_ab_forward.1} parent=0 // pred_check
    _
  $region19: #{neural_net_ab_forward.1} parent=0 // pred_check_branch
    %21 = sbr.rel (0) target = $region21
  $region20: #{neural_net_ab_forward.1} parent=0 // pred_region
    _
  $region21: #{neural_net_ab_forward.1} parent=0 // pred_fallthru
    _
  // Predicated region
  $region22: #{neural_net_ab_forward.1} parent=0 // pred_check
    _
  $region23: #{neural_net_ab_forward.1} parent=0 // pred_check_branch
    %23 = sbr.rel (0) target = $region25
  $region24: #{neural_net_ab_forward.1} parent=0 // pred_region
    _
  $region25: #{neural_net_ab_forward.1} parent=0 // pred_fallthru
    _
  // Predicated region
  $region26: #{neural_net_ab_forward.1} parent=0 // pred_check
    _
  $region27: #{neural_net_ab_forward.1} parent=0 // pred_check_branch
    %25 = sbr.rel (0) target = $region29
  $region28: #{neural_net_ab_forward.1} parent=0 // pred_region
    _
  $region29: #{neural_net_ab_forward.1} parent=0 // pred_fallthru
    _
  %v27 = vld [vmem:[%s0] sm:$0xff]
  %v28 = vld [vmem:[%s0 + $0x8] sm:$0xff]
  %v29 = vld [vmem:[%s0 + $0x10] sm:$0xff]
  %v30 = vld [vmem:[%s0 + $0x18] sm:$0xff]
  %v31 = vld [vmem:[%s0 + $0x20] sm:$0xff]
  %v32 = vld [vmem:[%s0 + $0x28] sm:$0xff]
  %v33 = vld [vmem:[%s0 + $0x30] sm:$0xff]
  %v34 = vld [vmem:[%s0 + $0x38] sm:$0xff]
  %v35 = vld [vmem:[%s0 + $0x40] sm:$0xff]
  %v36 = vld [vmem:[%s0 + $0x48] sm:$0xff]
  %v37 = vld [vmem:[%s0 + $0x50] sm:$0xff]
  %v38 = vld [vmem:[%s0 + $0x58] sm:$0xff]
  %v39 = vld [vmem:[%s0 + $0x60] sm:$0xff]
  %v40 = vld [vmem:[%s0 + $0x68] sm:$0xff]
  %v41 = vld [vmem:[%s0 + $0x70] sm:$0xff]
  %v42 = vld [vmem:[%s0 + $0x78] sm:$0xff]
  %v43 = vld [vmem:[%s0 + $0x80] sm:$0xff]
  %v44 = vld [vmem:[%s0 + $0x88] sm:$0xff]
  %v45 = vld [vmem:[%s0 + $0x90] sm:$0xff]
  %v46 = vld [vmem:[%s0 + $0x98] sm:$0xff]
  %v47 = vld [vmem:[%s0 + $0xa0] sm:$0xff]
  %v48 = vld [vmem:[%s0 + $0xa8] sm:$0xff]
  %v49 = vld [vmem:[%s0 + $0xb0] sm:$0xff]
  %v50 = vld [vmem:[%s0 + $0xb8] sm:$0xff]
  %v51 = vld [vmem:[%s0 + $0xc0] sm:$0xff]
  %v52 = vld [vmem:[%s0 + $0xc8] sm:$0xff]
  %v53 = vld [vmem:[%s0 + $0xd0] sm:$0xff]
  %v54 = vld [vmem:[%s0 + $0xd8] sm:$0xff]
  %v55 = vpack.c.bf16 %v34, %v27
  %v56 = vpack.c.bf16 %v35, %v28
  %v57 = vpack.c.bf16 %v36, %v29
  %v58 = vpack.c.bf16 %v37, %v30
  %v59 = vpack.c.bf16 %v38, %v31
  %v60 = vpack.c.bf16 %v39, %v32
  %v61 = vpack.c.bf16 %v40, %v33
  %v62 = vpack.c.bf16 %v48, %v41
  %v63 = vpack.c.bf16 %v49, %v42
  %v64 = vpack.c.bf16 %v50, %v43
  %v65 = vpack.c.bf16 %v51, %v44
  %v66 = vpack.c.bf16 %v52, %v45
  %v67 = vpack.c.bf16 %v53, %v46
  %v68 = vpack.c.bf16 %v54, %v47
  %v69 = vld [vmem:[%s1] sm:$0xf]
  %v70 = vld [vmem:[%s1 + $0x4] sm:$0xf]
  %v71 = vld [vmem:[%s1 + $0x8] sm:$0xf]
  %v72 = vld [vmem:[%s1 + $0xc] sm:$0xf]
  %v73 = vld [vmem:[%s1 + $0x10] sm:$0xf]
  %v74 = vld [vmem:[%s1 + $0x14] sm:$0xf]
  %v75 = vld [vmem:[%s1 + $0x18] sm:$0xf]
  %v76 = vld [vmem:[%s1 + $0x1c] sm:$0xf]
  %v77 = vld [vmem:[%s1 + $0x20] sm:$0xf]
  %v78 = vld [vmem:[%s1 + $0x24] sm:$0xf]
  %v79 = vld [vmem:[%s1 + $0x28] sm:$0xf]
  %v80 = vld [vmem:[%s1 + $0x2c] sm:$0xf]
  %v81 = vld [vmem:[%s1 + $0x30] sm:$0xf]
  %v82 = vld [vmem:[%s1 + $0x34] sm:$0xf]
  %v83 = vld [vmem:[%s1 + $0x38] sm:$0xf]
  %v84 = vld [vmem:[%s1 + $0x3c] sm:$0xf]
  %v85 = vld [vmem:[%s1 + $0x40] sm:$0xf]
  %v86 = vld [vmem:[%s1 + $0x44] sm:$0xf]
  %v87 = vld [vmem:[%s1 + $0x48] sm:$0xf]
  %v88 = vld [vmem:[%s1 + $0x4c] sm:$0xf]
  %v89 = vld [vmem:[%s1 + $0x50] sm:$0xf]
  %v90 = vld [vmem:[%s1 + $0x54] sm:$0xf]
  %v91 = vld [vmem:[%s1 + $0x58] sm:$0xf]
  %v92 = vld [vmem:[%s1 + $0x5c] sm:$0xf]
  %v93 = vld [vmem:[%s1 + $0x60] sm:$0xf]
  %v94 = vld [vmem:[%s1 + $0x64] sm:$0xf]
  %v95 = vld [vmem:[%s1 + $0x68] sm:$0xf]
  %v96 = vld [vmem:[%s1 + $0x6c] sm:$0xf]
  %v97 = vld [vmem:[%s1 + $0x70] sm:$0xf]
  %v98 = vld [vmem:[%s1 + $0x74] sm:$0xf]
  %v99 = vld [vmem:[%s1 + $0x78] sm:$0xf]
  %v100 = vld [vmem:[%s1 + $0x7c] sm:$0xf]
  %v101 = vld [vmem:[%s1 + $0x80] sm:$0xf]
  %v102 = vld [vmem:[%s1 + $0x84] sm:$0xf]
  %v103 = vld [vmem:[%s1 + $0x88] sm:$0xf]
  %v104 = vld [vmem:[%s1 + $0x8c] sm:$0xf]
  %v105 = vld [vmem:[%s1 + $0x90] sm:$0xf]
  %v106 = vld [vmem:[%s1 + $0x94] sm:$0xf]
  %v107 = vld [vmem:[%s1 + $0x98] sm:$0xf]
  %v108 = vld [vmem:[%s1 + $0x9c] sm:$0xf]
  %v109 = vld [vmem:[%s1 + $0xa0] sm:$0xf]
  %v110 = vld [vmem:[%s1 + $0xa4] sm:$0xf]
  %v111 = vld [vmem:[%s1 + $0xa8] sm:$0xf]
  %v112 = vld [vmem:[%s1 + $0xac] sm:$0xf]
  %v113 = vld [vmem:[%s1 + $0xb0] sm:$0xf]
  %v114 = vld [vmem:[%s1 + $0xb4] sm:$0xf]
  %v115 = vld [vmem:[%s1 + $0xb8] sm:$0xf]
  %v116 = vld [vmem:[%s1 + $0xbc] sm:$0xf]
  %v117 = vld [vmem:[%s1 + $0xc0] sm:$0xf]
  %v118 = vld [vmem:[%s1 + $0xc4] sm:$0xf]
  %v119 = vld [vmem:[%s1 + $0xc8] sm:$0xf]
  %v120 = vld [vmem:[%s1 + $0xcc] sm:$0xf]
  %v121 = vld [vmem:[%s1 + $0xd0] sm:$0xf]
  %v122 = vld [vmem:[%s1 + $0xd4] sm:$0xf]
  %v123 = vld [vmem:[%s1 + $0xd8] sm:$0xf]
  %v124 = vld [vmem:[%s1 + $0xdc] sm:$0xf]
  %v125 = vld [vmem:[%s1 + $0xe0] sm:$0xf]
  %v126 = vld [vmem:[%s1 + $0xe4] sm:$0xf]
  %v127 = vld [vmem:[%s1 + $0xe8] sm:$0xf]
  %v128 = vld [vmem:[%s1 + $0xec] sm:$0xf]
  %v129 = vld [vmem:[%s1 + $0xf0] sm:$0xf]
  %v130 = vld [vmem:[%s1 + $0xf4] sm:$0xf]
  %v131 = vld [vmem:[%s1 + $0xf8] sm:$0xf]
  %v132 = vld [vmem:[%s1 + $0xfc] sm:$0xf]
  %v133 = vld [vmem:[%s1 + $0x100] sm:$0xf]
  %v134 = vld [vmem:[%s1 + $0x104] sm:$0xf]
  %v135 = vld [vmem:[%s1 + $0x108] sm:$0xf]
  %v136 = vld [vmem:[%s1 + $0x10c] sm:$0xf]
  %v137 = vld [vmem:[%s1 + $0x110] sm:$0xf]
  %v138 = vld [vmem:[%s1 + $0x114] sm:$0xf]
  %v139 = vld [vmem:[%s1 + $0x118] sm:$0xf]
  %v140 = vld [vmem:[%s1 + $0x11c] sm:$0xf]
  %v141 = vld [vmem:[%s1 + $0x120] sm:$0xf]
  %v142 = vld [vmem:[%s1 + $0x124] sm:$0xf]
  %v143 = vld [vmem:[%s1 + $0x128] sm:$0xf]
  %v144 = vld [vmem:[%s1 + $0x12c] sm:$0xf]
  %v145 = vld [vmem:[%s1 + $0x130] sm:$0xf]
  %v146 = vld [vmem:[%s1 + $0x134] sm:$0xf]
  %v147 = vld [vmem:[%s1 + $0x138] sm:$0xf]
  %v148 = vld [vmem:[%s1 + $0x13c] sm:$0xf]
  %v149 = vld [vmem:[%s1 + $0x140] sm:$0xf]
  %v150 = vld [vmem:[%s1 + $0x144] sm:$0xf]
  %v151 = vld [vmem:[%s1 + $0x148] sm:$0xf]
  %v152 = vld [vmem:[%s1 + $0x14c] sm:$0xf]
  %v153 = vld [vmem:[%s1 + $0x150] sm:$0xf]
  %v154 = vld [vmem:[%s1 + $0x154] sm:$0xf]
  %v155 = vld [vmem:[%s1 + $0x158] sm:$0xf]
  %v156 = vld [vmem:[%s1 + $0x15c] sm:$0xf]
  %v157 = vld [vmem:[%s1 + $0x160] sm:$0xf]
  %v158 = vld [vmem:[%s1 + $0x164] sm:$0xf]
  %v159 = vld [vmem:[%s1 + $0x168] sm:$0xf]
  %v160 = vld [vmem:[%s1 + $0x16c] sm:$0xf]
  %v161 = vld [vmem:[%s1 + $0x170] sm:$0xf]
  %v162 = vld [vmem:[%s1 + $0x174] sm:$0xf]
  %v163 = vld [vmem:[%s1 + $0x178] sm:$0xf]
  %v164 = vld [vmem:[%s1 + $0x17c] sm:$0xf]
  %v165 = vld [vmem:[%s1 + $0x180] sm:$0xf]
  %v166 = vld [vmem:[%s1 + $0x184] sm:$0xf]
  %v167 = vld [vmem:[%s2] sm:$0x1]
  %v169 = vlaneseq
  %v170 = vshrl.u32 %v169, 7
  %v171 = vsub.s32 0, %v170
  %v172 = vrot.slane %v167, %v171
  %v272 = vunpack.c.l.b16 %v69
  %v273 = vunpack.c.l.b16 %v70
  %v274 = vunpack.c.l.b16 %v71
  %v275 = vunpack.c.l.b16 %v72
  %v276 = vunpack.c.l.b16 %v73
  %v277 = vunpack.c.l.b16 %v74
  %v278 = vunpack.c.l.b16 %v75
  %v279 = vunpack.c.l.b16 %v76
  %v280 = vunpack.c.l.b16 %v77
  %v281 = vunpack.c.l.b16 %v78
  %v282 = vunpack.c.l.b16 %v79
  %v283 = vunpack.c.l.b16 %v80
  %v284 = vunpack.c.l.b16 %v81
  %v285 = vunpack.c.l.b16 %v82
  %v286 = vunpack.c.l.b16 %v83
  %v287 = vunpack.c.l.b16 %v84
  %v288 = vunpack.c.l.b16 %v85
  %v289 = vunpack.c.l.b16 %v86
  %v290 = vunpack.c.l.b16 %v87
  %v291 = vunpack.c.l.b16 %v88
  %v292 = vunpack.c.l.b16 %v89
  %v293 = vunpack.c.l.b16 %v90
  %v294 = vunpack.c.l.b16 %v91
  %v295 = vunpack.c.l.b16 %v92
  %v296 = vunpack.c.l.b16 %v93
  %v297 = vunpack.c.l.b16 %v94
  %v298 = vunpack.c.l.b16 %v95
  %v299 = vunpack.c.l.b16 %v96
  %v300 = vunpack.c.l.b16 %v97
  %v301 = vunpack.c.l.b16 %v98
  %v302 = vunpack.c.l.b16 %v99
  %v303 = vunpack.c.l.b16 %v100
  %v304 = vunpack.c.l.b16 %v101
  %v305 = vunpack.c.l.b16 %v102
  %v306 = vunpack.c.l.b16 %v103
  %v307 = vunpack.c.l.b16 %v104
  %v308 = vunpack.c.l.b16 %v105
  %v309 = vunpack.c.l.b16 %v106
  %v310 = vunpack.c.l.b16 %v107
  %v311 = vunpack.c.l.b16 %v108
  %v312 = vunpack.c.l.b16 %v109
  %v313 = vunpack.c.l.b16 %v110
  %v314 = vunpack.c.l.b16 %v111
  %v315 = vunpack.c.l.b16 %v112
  %v316 = vunpack.c.l.b16 %v113
  %v317 = vunpack.c.l.b16 %v114
  %v318 = vunpack.c.l.b16 %v115
  %v319 = vunpack.c.l.b16 %v116
  %v320 = vunpack.c.l.b16 %v117
  %v321 = vunpack.c.l.b16 %v118
  %v322 = vunpack.c.l.b16 %v119
  %v323 = vunpack.c.l.b16 %v120
  %v324 = vunpack.c.l.b16 %v121
  %v325 = vunpack.c.l.b16 %v122
  %v326 = vunpack.c.l.b16 %v123
  %v327 = vunpack.c.l.b16 %v124
  %v328 = vunpack.c.l.b16 %v125
  %v329 = vunpack.c.l.b16 %v126
  %v330 = vunpack.c.l.b16 %v127
  %v331 = vunpack.c.l.b16 %v128
  %v332 = vunpack.c.l.b16 %v129
  %v333 = vunpack.c.l.b16 %v130
  %v334 = vunpack.c.l.b16 %v131
  %v335 = vunpack.c.l.b16 %v132
  %v336 = vunpack.c.l.b16 %v133
  %v337 = vunpack.c.l.b16 %v134
  %v338 = vunpack.c.l.b16 %v135
  %v339 = vunpack.c.l.b16 %v136
  %v340 = vunpack.c.l.b16 %v137
  %v341 = vunpack.c.l.b16 %v138
  %v342 = vunpack.c.l.b16 %v139
  %v343 = vunpack.c.l.b16 %v140
  %v344 = vunpack.c.l.b16 %v141
  %v345 = vunpack.c.l.b16 %v142
  %v346 = vunpack.c.l.b16 %v143
  %v347 = vunpack.c.l.b16 %v144
  %v348 = vunpack.c.l.b16 %v145
  %v349 = vunpack.c.l.b16 %v146
  %v350 = vunpack.c.l.b16 %v147
  %v351 = vunpack.c.l.b16 %v148
  %v352 = vunpack.c.l.b16 %v149
  %v353 = vunpack.c.l.b16 %v150
  %v354 = vunpack.c.l.b16 %v151
  %v355 = vunpack.c.l.b16 %v152
  %v356 = vunpack.c.l.b16 %v153
  %v357 = vunpack.c.l.b16 %v154
  %v358 = vunpack.c.l.b16 %v155
  %v359 = vunpack.c.l.b16 %v156
  %v360 = vunpack.c.l.b16 %v157
  %v361 = vunpack.c.l.b16 %v158
  %v362 = vunpack.c.l.b16 %v159
  %v363 = vunpack.c.l.b16 %v160
  %v364 = vunpack.c.l.b16 %v161
  %v365 = vunpack.c.l.b16 %v162
  %v366 = vunpack.c.l.b16 %v163
  %v367 = vunpack.c.l.b16 %v164
  %v368 = vunpack.c.l.b16 %v165
  %v369 = vunpack.c.l.b16 %v166
  %v370 = vpack.c.b16 %v273, %v272
  %v371 = vpack.c.b16 %v275, %v274
  %v372 = vpack.c.b16 %v277, %v276
  %v373 = vpack.c.b16 %v279, %v278
  %v374 = vpack.c.b16 %v281, %v280
  %v375 = vpack.c.b16 %v283, %v282
  %v376 = vpack.c.b16 %v285, %v284
  %v377 = vpack.c.b16 %v287, %v286
  %v378 = vpack.c.b16 %v289, %v288
  %v379 = vpack.c.b16 %v291, %v290
  %v380 = vpack.c.b16 %v293, %v292
  %v381 = vpack.c.b16 %v295, %v294
  %v382 = vpack.c.b16 %v297, %v296
  %v383 = vpack.c.b16 %v299, %v298
  %v384 = vpack.c.b16 %v301, %v300
  %v385 = vpack.c.b16 %v303, %v302
  %v386 = vpack.c.b16 %v305, %v304
  %v387 = vpack.c.b16 %v307, %v306
  %v388 = vpack.c.b16 %v309, %v308
  %v389 = vpack.c.b16 %v311, %v310
  %v390 = vpack.c.b16 %v313, %v312
  %v391 = vpack.c.b16 %v315, %v314
  %v392 = vpack.c.b16 %v317, %v316
  %v393 = vpack.c.b16 %v319, %v318
  %v394 = vpack.c.b16 %v321, %v320
  %v395 = vpack.c.b16 %v323, %v322
  %v396 = vpack.c.b16 %v325, %v324
  %v397 = vpack.c.b16 %v327, %v326
  %v398 = vpack.c.b16 %v329, %v328
  %v399 = vpack.c.b16 %v331, %v330
  %v400 = vpack.c.b16 %v333, %v332
  %v401 = vpack.c.b16 %v335, %v334
  %v402 = vpack.c.b16 %v337, %v336
  %v403 = vpack.c.b16 %v339, %v338
  %v404 = vpack.c.b16 %v341, %v340
  %v405 = vpack.c.b16 %v343, %v342
  %v406 = vpack.c.b16 %v345, %v344
  %v407 = vpack.c.b16 %v347, %v346
  %v408 = vpack.c.b16 %v349, %v348
  %v409 = vpack.c.b16 %v351, %v350
  %v410 = vpack.c.b16 %v353, %v352
  %v411 = vpack.c.b16 %v355, %v354
  %v412 = vpack.c.b16 %v357, %v356
  %v413 = vpack.c.b16 %v359, %v358
  %v414 = vpack.c.b16 %v361, %v360
  %v415 = vpack.c.b16 %v363, %v362
  %v416 = vpack.c.b16 %v365, %v364
  %v417 = vpack.c.b16 %v367, %v366
  %v418 = vpack.c.b16 %v369, %v368
  %vm468 = vcmask 130048
  %v470 = vsel %vm468, %v61, 0
  %v473 = vsel %vm468, %v68, 0
  %475 = vmatprep.subr.bf16.mxu0 0
  %476 = vmatpush1.bf16.msra.mxu0 %v377
  %477 = vmatprep.subr.bf16.mxu0 0
  %478 = vmatpush1.bf16.msra.mxu0 %v376
  %479 = vmatprep.subr.bf16.mxu0 0
  %480 = vmatpush1.bf16.msra.mxu0 %v375
  %481 = vmatprep.subr.bf16.mxu0 0
  %482 = vmatpush1.bf16.msra.mxu0 %v374
  %483 = vmatprep.subr.bf16.mxu0 0
  %484 = vmatpush1.bf16.msra.mxu0 %v373
  %485 = vmatprep.subr.bf16.mxu0 0
  %486 = vmatpush1.bf16.msra.mxu0 %v372
  %487 = vmatprep.subr.bf16.mxu0 0
  %488 = vmatpush1.bf16.msra.mxu0 %v371
  %489 = vmatprep.subr.bf16.mxu0 0
  %490 = vmatpush1.bf16.msra.mxu0 %v370
  %491 = vmatprep.subr.bf16.mxu0 0
  %492 = vmatpush2.bf16.msra.mxu0 %v385
  %493 = vmatprep.subr.bf16.mxu0 0
  %494 = vmatpush2.bf16.msra.mxu0 %v384
  %495 = vmatprep.subr.bf16.mxu0 0
  %496 = vmatpush2.bf16.msra.mxu0 %v383
  %497 = vmatprep.subr.bf16.mxu0 0
  %498 = vmatpush2.bf16.msra.mxu0 %v382
  %499 = vmatprep.subr.bf16.mxu0 0
  %500 = vmatpush2.bf16.msra.mxu0 %v381
  %501 = vmatprep.subr.bf16.mxu0 0
  %502 = vmatpush2.bf16.msra.mxu0 %v380
  %503 = vmatprep.subr.bf16.mxu0 0
  %504 = vmatpush2.bf16.msra.mxu0 %v379
  %505 = vmatprep.subr.bf16.mxu0 0
  %506 = vmatpush2.bf16.msra.mxu0 %v378
  %507 = vmatprep.mubr.bf16.mxu0 %v56
  %508 = vmatmul.mubr.bf16.gmra.mxu0 %v55
  %v509 = vpop.f32.mrf.mxu0
  %v510 = vadd.f32 %v172, %v509
  %v511 = vpop.f32.mrf.mxu0
  %v512 = vpop.f32.mrf.mxu0
  %v513 = vadd.f32 %v172, %v512
  %v514 = vpop.f32.mrf.mxu0
  %515 = vmatprep.mubr.bf16.mxu0 %v63
  %516 = vmatmul.mubr.bf16.gmra.mxu0 %v62
  %v517 = vpop.f32.mrf.mxu0
  %v518 = vadd.f32 %v172, %v517
  %v519 = vpop.f32.mrf.mxu0
  %v520 = vpop.f32.mrf.mxu0
  %v521 = vadd.f32 %v172, %v520
  %v522 = vpop.f32.mrf.mxu0
  %523 = vdwg.mxu0
  %524 = vmatprep.subr.bf16.mxu0 0
  %525 = vmatpush1.bf16.msra.mxu0 %v393
  %526 = vmatprep.subr.bf16.mxu0 0
  %527 = vmatpush1.bf16.msra.mxu0 %v392
  %528 = vmatprep.subr.bf16.mxu0 0
  %529 = vmatpush1.bf16.msra.mxu0 %v391
  %530 = vmatprep.subr.bf16.mxu0 0
  %531 = vmatpush1.bf16.msra.mxu0 %v390
  %532 = vmatprep.subr.bf16.mxu0 0
  %533 = vmatpush1.bf16.msra.mxu0 %v389
  %534 = vmatprep.subr.bf16.mxu0 0
  %535 = vmatpush1.bf16.msra.mxu0 %v388
  %536 = vmatprep.subr.bf16.mxu0 0
  %537 = vmatpush1.bf16.msra.mxu0 %v387
  %538 = vmatprep.subr.bf16.mxu0 0
  %539 = vmatpush1.bf16.msra.mxu0 %v386
  %540 = vmatprep.subr.bf16.mxu0 0
  %541 = vmatpush2.bf16.msra.mxu0 %v401
  %542 = vmatprep.subr.bf16.mxu0 0
  %543 = vmatpush2.bf16.msra.mxu0 %v400
  %544 = vmatprep.subr.bf16.mxu0 0
  %545 = vmatpush2.bf16.msra.mxu0 %v399
  %546 = vmatprep.subr.bf16.mxu0 0
  %547 = vmatpush2.bf16.msra.mxu0 %v398
  %548 = vmatprep.subr.bf16.mxu0 0
  %549 = vmatpush2.bf16.msra.mxu0 %v397
  %550 = vmatprep.subr.bf16.mxu0 0
  %551 = vmatpush2.bf16.msra.mxu0 %v396
  %552 = vmatprep.subr.bf16.mxu0 0
  %553 = vmatpush2.bf16.msra.mxu0 %v395
  %554 = vmatprep.subr.bf16.mxu0 0
  %555 = vmatpush2.bf16.msra.mxu0 %v394
  %556 = vmatprep.mubr.bf16.mxu0 %v58
  %557 = vmatmul.mubr.bf16.gmra.mxu0 %v57
  %v558 = vpop.f32.mrf.mxu0
  %v559 = vadd.f32 %v510, %v558
  %v560 = vpop.f32.mrf.mxu0
  %v561 = vpop.f32.mrf.mxu0
  %v562 = vadd.f32 %v513, %v561
  %v563 = vpop.f32.mrf.mxu0
  %564 = vmatprep.mubr.bf16.mxu0 %v65
  %565 = vmatmul.mubr.bf16.gmra.mxu0 %v64
  %v566 = vpop.f32.mrf.mxu0
  %v567 = vadd.f32 %v518, %v566
  %v568 = vpop.f32.mrf.mxu0
  %v569 = vpop.f32.mrf.mxu0
  %v570 = vadd.f32 %v521, %v569
  %v571 = vpop.f32.mrf.mxu0
  %572 = vdwg.mxu0
  %573 = vmatprep.subr.bf16.mxu0 0
  %574 = vmatpush1.bf16.msra.mxu0 %v409
  %575 = vmatprep.subr.bf16.mxu0 0
  %576 = vmatpush1.bf16.msra.mxu0 %v408
  %577 = vmatprep.subr.bf16.mxu0 0
  %578 = vmatpush1.bf16.msra.mxu0 %v407
  %579 = vmatprep.subr.bf16.mxu0 0
  %580 = vmatpush1.bf16.msra.mxu0 %v406
  %581 = vmatprep.subr.bf16.mxu0 0
  %582 = vmatpush1.bf16.msra.mxu0 %v405
  %583 = vmatprep.subr.bf16.mxu0 0
  %584 = vmatpush1.bf16.msra.mxu0 %v404
  %585 = vmatprep.subr.bf16.mxu0 0
  %586 = vmatpush1.bf16.msra.mxu0 %v403
  %587 = vmatprep.subr.bf16.mxu0 0
  %588 = vmatpush1.bf16.msra.mxu0 %v402
  %589 = vmatprep.subr.bf16.mxu0 0
  %590 = vmatpush2.bf16.msra.mxu0 %v417
  %591 = vmatprep.subr.bf16.mxu0 0
  %592 = vmatpush2.bf16.msra.mxu0 %v416
  %593 = vmatprep.subr.bf16.mxu0 0
  %594 = vmatpush2.bf16.msra.mxu0 %v415
  %595 = vmatprep.subr.bf16.mxu0 0
  %596 = vmatpush2.bf16.msra.mxu0 %v414
  %597 = vmatprep.subr.bf16.mxu0 0
  %598 = vmatpush2.bf16.msra.mxu0 %v413
  %599 = vmatprep.subr.bf16.mxu0 0
  %600 = vmatpush2.bf16.msra.mxu0 %v412
  %601 = vmatprep.subr.bf16.mxu0 0
  %602 = vmatpush2.bf16.msra.mxu0 %v411
  %603 = vmatprep.subr.bf16.mxu0 0
  %604 = vmatpush2.bf16.msra.mxu0 %v410
  %605 = vmatprep.mubr.bf16.mxu0 %v60
  %606 = vmatmul.mubr.bf16.gmra.mxu0 %v59
  %v607 = vpop.f32.mrf.mxu0
  %v608 = vadd.f32 %v559, %v607
  %v609 = vpop.f32.mrf.mxu0
  %v610 = vpop.f32.mrf.mxu0
  %v611 = vadd.f32 %v562, %v610
  %v612 = vpop.f32.mrf.mxu0
  %613 = vmatprep.mubr.bf16.mxu0 %v67
  %614 = vmatmul.mubr.bf16.gmra.mxu0 %v66
  %v615 = vpop.f32.mrf.mxu0
  %v616 = vadd.f32 %v567, %v615
  %v617 = vpop.f32.mrf.mxu0
  %v618 = vpop.f32.mrf.mxu0
  %v619 = vadd.f32 %v570, %v618
  %v620 = vpop.f32.mrf.mxu0
  %621 = vdwg.mxu0
  %622 = vmatprep.subr.bf16.mxu0 0
  %623 = vmatpush1.bf16.msra.mxu0 0
  %624 = vmatprep.subr.bf16.mxu0 0
  %625 = vmatpush1.bf16.msra.mxu0 0
  %626 = vmatprep.subr.bf16.mxu0 0
  %627 = vmatpush1.bf16.msra.mxu0 0
  %628 = vmatprep.subr.bf16.mxu0 0
  %629 = vmatpush1.bf16.msra.mxu0 0
  %630 = vmatprep.subr.bf16.mxu0 0
  %631 = vmatpush1.bf16.msra.mxu0 0
  %632 = vmatprep.subr.bf16.mxu0 0
  %633 = vmatpush1.bf16.msra.mxu0 0
  %634 = vmatprep.subr.bf16.mxu0 0
  %635 = vmatpush1.bf16.msra.mxu0 0
  %636 = vmatprep.subr.bf16.mxu0 0
  %637 = vmatpush1.bf16.msra.mxu0 %v418
  %638 = vmatprep.subr.bf16.mxu0 0
  %639 = vmatpush2.bf16.msra.mxu0 0
  %640 = vmatprep.subr.bf16.mxu0 0
  %641 = vmatpush2.bf16.msra.mxu0 0
  %642 = vmatprep.subr.bf16.mxu0 0
  %643 = vmatpush2.bf16.msra.mxu0 0
  %644 = vmatprep.subr.bf16.mxu0 0
  %645 = vmatpush2.bf16.msra.mxu0 0
  %646 = vmatprep.subr.bf16.mxu0 0
  %647 = vmatpush2.bf16.msra.mxu0 0
  %648 = vmatprep.subr.bf16.mxu0 0
  %649 = vmatpush2.bf16.msra.mxu0 0
  %650 = vmatprep.subr.bf16.mxu0 0
  %651 = vmatpush2.bf16.msra.mxu0 0
  %652 = vmatprep.subr.bf16.mxu0 0
  %653 = vmatpush2.bf16.msra.mxu0 0
  %654 = vmatprep.mubr.bf16.mxu0 0
  %655 = vmatmul.mubr.bf16.gmra.mxu0 %v470
  %v656 = vpop.f32.mrf.mxu0
  %v657 = vadd.f32 %v608, %v656
  %v658 = vpop.f32.mrf.mxu0
  %v659 = vpop.f32.mrf.mxu0
  %v660 = vadd.f32 %v611, %v659
  %v661 = vpop.f32.mrf.mxu0
  %662 = vmatprep.mubr.bf16.mxu0 0
  %663 = vmatmul.mubr.bf16.gmra.mxu0 %v473
  %v664 = vpop.f32.mrf.mxu0
  %v665 = vadd.f32 %v616, %v664
  %v666 = vpop.f32.mrf.mxu0
  %v667 = vpop.f32.mrf.mxu0
  %v668 = vadd.f32 %v619, %v667
  %v669 = vpop.f32.mrf.mxu0
  %670 = vdwg.mxu0
  %v671 = vmax.f32 %v657, 0.0
  %v672 = vmax.f32 %v660, 0.0
  %v673 = vmax.f32 %v665, 0.0
  %v674 = vmax.f32 %v668, 0.0
  %v675 = vld [vmem:[%s3] sm:$0xff]
  %v676 = vld [vmem:[%s3 + $0x8] sm:$0xff]
  %v677 = vld [vmem:[%s3 + $0x10] sm:$0xff]
  %v678 = vld [vmem:[%s3 + $0x18] sm:$0xff]
  %v679 = vld [vmem:[%s3 + $0x20] sm:$0xff]
  %v680 = vld [vmem:[%s3 + $0x28] sm:$0xff]
  %v681 = vld [vmem:[%s3 + $0x30] sm:$0xff]
  %v682 = vld [vmem:[%s3 + $0x38] sm:$0xff]
  %v683 = vld [vmem:[%s3 + $0x40] sm:$0xff]
  %v684 = vld [vmem:[%s3 + $0x48] sm:$0xff]
  %v685 = vld [vmem:[%s3 + $0x50] sm:$0xff]
  %v686 = vld [vmem:[%s3 + $0x58] sm:$0xff]
  %v687 = vld [vmem:[%s3 + $0x60] sm:$0xff]
  %v688 = vld [vmem:[%s3 + $0x68] sm:$0xff]
  %v689 = vld [vmem:[%s3 + $0x70] sm:$0xff]
  %v690 = vld [vmem:[%s3 + $0x78] sm:$0xff]
  %v691 = vld [vmem:[%s4] sm:$0x1]
  %v693 = vlaneseq
  %v694 = vshrl.u32 %v693, 7
  %v695 = vsub.s32 0, %v694
  %v696 = vrot.slane %v691, %v695
  %698 = vmatprep.subr.mxu0 0.0
  %699 = vmatpush1.msra.mxu0 %v690
  %700 = vmatprep.subr.mxu0 0.0
  %701 = vmatpush1.msra.mxu0 %v689
  %702 = vmatprep.subr.mxu0 0.0
  %703 = vmatpush1.msra.mxu0 %v688
  %704 = vmatprep.subr.mxu0 0.0
  %705 = vmatpush1.msra.mxu0 %v687
  %706 = vmatprep.subr.mxu0 0.0
  %707 = vmatpush1.msra.mxu0 %v686
  %708 = vmatprep.subr.mxu0 0.0
  %709 = vmatpush1.msra.mxu0 %v685
  %710 = vmatprep.subr.mxu0 0.0
  %711 = vmatpush1.msra.mxu0 %v684
  %712 = vmatprep.subr.mxu0 0.0
  %713 = vmatpush1.msra.mxu0 %v683
  %714 = vmatprep.subr.mxu0 0.0
  %715 = vmatpush1.msra.mxu0 %v682
  %716 = vmatprep.subr.mxu0 0.0
  %717 = vmatpush1.msra.mxu0 %v681
  %718 = vmatprep.subr.mxu0 0.0
  %719 = vmatpush1.msra.mxu0 %v680
  %720 = vmatprep.subr.mxu0 0.0
  %721 = vmatpush1.msra.mxu0 %v679
  %722 = vmatprep.subr.mxu0 0.0
  %723 = vmatpush1.msra.mxu0 %v678
  %724 = vmatprep.subr.mxu0 0.0
  %725 = vmatpush1.msra.mxu0 %v677
  %726 = vmatprep.subr.mxu0 0.0
  %727 = vmatpush1.msra.mxu0 %v676
  %728 = vmatprep.subr.mxu0 0.0
  %729 = vmatpush1.msra.mxu0 %v675
  %730 = vmatprep.subr.mxu0 0.0
  %731 = vmatpush2.msra.mxu0 0.0
  %732 = vmatprep.subr.mxu0 0.0
  %733 = vmatpush2.msra.mxu0 0.0
  %734 = vmatprep.subr.mxu0 0.0
  %735 = vmatpush2.msra.mxu0 0.0
  %736 = vmatprep.subr.mxu0 0.0
  %737 = vmatpush2.msra.mxu0 0.0
  %738 = vmatprep.subr.mxu0 0.0
  %739 = vmatpush2.msra.mxu0 0.0
  %740 = vmatprep.subr.mxu0 0.0
  %741 = vmatpush2.msra.mxu0 0.0
  %742 = vmatprep.subr.mxu0 0.0
  %743 = vmatpush2.msra.mxu0 0.0
  %744 = vmatprep.subr.mxu0 0.0
  %745 = vmatpush2.msra.mxu0 0.0
  %746 = vmatprep.subr.mxu0 0.0
  %747 = vmatpush2.msra.mxu0 0.0
  %748 = vmatprep.subr.mxu0 0.0
  %749 = vmatpush2.msra.mxu0 0.0
  %750 = vmatprep.subr.mxu0 0.0
  %751 = vmatpush2.msra.mxu0 0.0
  %752 = vmatprep.subr.mxu0 0.0
  %753 = vmatpush2.msra.mxu0 0.0
  %754 = vmatprep.subr.mxu0 0.0
  %755 = vmatpush2.msra.mxu0 0.0
  %756 = vmatprep.subr.mxu0 0.0
  %757 = vmatpush2.msra.mxu0 0.0
  %758 = vmatprep.subr.mxu0 0.0
  %759 = vmatpush2.msra.mxu0 0.0
  %760 = vmatprep.subr.mxu0 0.0
  %761 = vmatpush2.msra.mxu0 0.0
  %762 = vmatprep.mubr.f32.mxu0 0.0
  %763 = vmatmul.mubr.f32.gmra.mxu0 %v671
  %v764 = vpop.f32.mrf.mxu0
  %v765 = vadd.f32 %v696, %v764
  %v766 = vpop.f32.mrf.mxu0
  %767 = vmatprep.mubr.f32.mxu0 0.0
  %768 = vmatmul.mubr.f32.gmra.mxu0 %v672
  %v769 = vpop.f32.mrf.mxu0
  %v770 = vadd.f32 %v696, %v769
  %v771 = vpop.f32.mrf.mxu0
  %772 = vmatprep.mubr.f32.mxu0 0.0
  %773 = vmatmul.mubr.f32.gmra.mxu0 %v673
  %v774 = vpop.f32.mrf.mxu0
  %v775 = vadd.f32 %v696, %v774
  %v776 = vpop.f32.mrf.mxu0
  %777 = vmatprep.mubr.f32.mxu0 0.0
  %778 = vmatmul.mubr.f32.gmra.mxu0 %v674
  %v779 = vpop.f32.mrf.mxu0
  %v780 = vadd.f32 %v696, %v779
  %v781 = vpop.f32.mrf.mxu0
  %782 = vdwg.mxu0
  %v783 = vmax.f32 %v765, 0.0
  %v784 = vmax.f32 %v770, 0.0
  %v785 = vmax.f32 %v775, 0.0
  %v786 = vmax.f32 %v780, 0.0
  %v787 = vld [vmem:[%s5] sm:$0xff]
  %v788 = vld [vmem:[%s5 + $0x8] sm:$0xff]
  %v789 = vld [vmem:[%s5 + $0x10] sm:$0xff]
  %v790 = vld [vmem:[%s5 + $0x18] sm:$0xff]
  %v791 = vld [vmem:[%s5 + $0x20] sm:$0xff]
  %v792 = vld [vmem:[%s5 + $0x28] sm:$0xff]
  %v793 = vld [vmem:[%s5 + $0x30] sm:$0xff]
  %v794 = vld [vmem:[%s5 + $0x38] sm:$0xff]
  %v795 = vld [vmem:[%s5 + $0x40] sm:$0xff]
  %v796 = vld [vmem:[%s5 + $0x48] sm:$0xff]
  %v797 = vld [vmem:[%s5 + $0x50] sm:$0xff]
  %v798 = vld [vmem:[%s5 + $0x58] sm:$0xff]
  %v799 = vld [vmem:[%s5 + $0x60] sm:$0xff]
  %v800 = vld [vmem:[%s5 + $0x68] sm:$0xff]
  %v801 = vld [vmem:[%s5 + $0x70] sm:$0xff]
  %v802 = vld [vmem:[%s5 + $0x78] sm:$0xff]
  %v803 = vld [vmem:[%s6] sm:$0x1]
  %v805 = vlaneseq
  %v806 = vshrl.u32 %v805, 7
  %v807 = vsub.s32 0, %v806
  %v808 = vrot.slane %v803, %v807
  %810 = vmatprep.subr.mxu0 0.0
  %811 = vmatpush1.msra.mxu0 %v802
  %812 = vmatprep.subr.mxu0 0.0
  %813 = vmatpush1.msra.mxu0 %v801
  %814 = vmatprep.subr.mxu0 0.0
  %815 = vmatpush1.msra.mxu0 %v800
  %816 = vmatprep.subr.mxu0 0.0
  %817 = vmatpush1.msra.mxu0 %v799
  %818 = vmatprep.subr.mxu0 0.0
  %819 = vmatpush1.msra.mxu0 %v798
  %820 = vmatprep.subr.mxu0 0.0
  %821 = vmatpush1.msra.mxu0 %v797
  %822 = vmatprep.subr.mxu0 0.0
  %823 = vmatpush1.msra.mxu0 %v796
  %824 = vmatprep.subr.mxu0 0.0
  %825 = vmatpush1.msra.mxu0 %v795
  %826 = vmatprep.subr.mxu0 0.0
  %827 = vmatpush1.msra.mxu0 %v794
  %828 = vmatprep.subr.mxu0 0.0
  %829 = vmatpush1.msra.mxu0 %v793
  %830 = vmatprep.subr.mxu0 0.0
  %831 = vmatpush1.msra.mxu0 %v792
  %832 = vmatprep.subr.mxu0 0.0
  %833 = vmatpush1.msra.mxu0 %v791
  %834 = vmatprep.subr.mxu0 0.0
  %835 = vmatpush1.msra.mxu0 %v790
  %836 = vmatprep.subr.mxu0 0.0
  %837 = vmatpush1.msra.mxu0 %v789
  %838 = vmatprep.subr.mxu0 0.0
  %839 = vmatpush1.msra.mxu0 %v788
  %840 = vmatprep.subr.mxu0 0.0
  %841 = vmatpush1.msra.mxu0 %v787
  %842 = vmatprep.subr.mxu0 0.0
  %843 = vmatpush2.msra.mxu0 0.0
  %844 = vmatprep.subr.mxu0 0.0
  %845 = vmatpush2.msra.mxu0 0.0
  %846 = vmatprep.subr.mxu0 0.0
  %847 = vmatpush2.msra.mxu0 0.0
  %848 = vmatprep.subr.mxu0 0.0
  %849 = vmatpush2.msra.mxu0 0.0
  %850 = vmatprep.subr.mxu0 0.0
  %851 = vmatpush2.msra.mxu0 0.0
  %852 = vmatprep.subr.mxu0 0.0
  %853 = vmatpush2.msra.mxu0 0.0
  %854 = vmatprep.subr.mxu0 0.0
  %855 = vmatpush2.msra.mxu0 0.0
  %856 = vmatprep.subr.mxu0 0.0
  %857 = vmatpush2.msra.mxu0 0.0
  %858 = vmatprep.subr.mxu0 0.0
  %859 = vmatpush2.msra.mxu0 0.0
  %860 = vmatprep.subr.mxu0 0.0
  %861 = vmatpush2.msra.mxu0 0.0
  %862 = vmatprep.subr.mxu0 0.0
  %863 = vmatpush2.msra.mxu0 0.0
  %864 = vmatprep.subr.mxu0 0.0
  %865 = vmatpush2.msra.mxu0 0.0
  %866 = vmatprep.subr.mxu0 0.0
  %867 = vmatpush2.msra.mxu0 0.0
  %868 = vmatprep.subr.mxu0 0.0
  %869 = vmatpush2.msra.mxu0 0.0
  %870 = vmatprep.subr.mxu0 0.0
  %871 = vmatpush2.msra.mxu0 0.0
  %872 = vmatprep.subr.mxu0 0.0
  %873 = vmatpush2.msra.mxu0 0.0
  %874 = vmatprep.mubr.f32.mxu0 0.0
  %875 = vmatmul.mubr.f32.gmra.mxu0 %v783
  %v876 = vpop.f32.mrf.mxu0
  %v877 = vadd.f32 %v808, %v876
  %v878 = vpop.f32.mrf.mxu0
  %879 = vmatprep.mubr.f32.mxu0 0.0
  %880 = vmatmul.mubr.f32.gmra.mxu0 %v784
  %v881 = vpop.f32.mrf.mxu0
  %v882 = vadd.f32 %v808, %v881
  %v883 = vpop.f32.mrf.mxu0
  %884 = vmatprep.mubr.f32.mxu0 0.0
  %885 = vmatmul.mubr.f32.gmra.mxu0 %v785
  %v886 = vpop.f32.mrf.mxu0
  %v887 = vadd.f32 %v808, %v886
  %v888 = vpop.f32.mrf.mxu0
  %889 = vmatprep.mubr.f32.mxu0 0.0
  %890 = vmatmul.mubr.f32.gmra.mxu0 %v786
  %v891 = vpop.f32.mrf.mxu0
  %v892 = vadd.f32 %v808, %v891
  %v893 = vpop.f32.mrf.mxu0
  %894 = vdwg.mxu0
  %895 = vmax.xlane.f32.xlu0 %v877
  %v896 = vpop.xlane.xlu0 %895
  %897 = vmax.xlane.f32.xlu0 %v882
  %v898 = vpop.xlane.xlu0 %897
  %899 = vmax.xlane.f32.xlu0 %v887
  %v900 = vpop.xlane.xlu0 %899
  %901 = vmax.xlane.f32.xlu0 %v892
  %v902 = vpop.xlane.xlu0 %901
  %v903 = vsub.f32 %v877, %v896
  %v904 = vsub.f32 %v882, %v898
  %v905 = vsub.f32 %v887, %v900
  %v906 = vsub.f32 %v892, %v902
  %v907 = vmul.f32 %v903, 1.442695
  %v908 = vpow.pop %v907
  %v909 = vmul.f32 %v904, 1.442695
  %v910 = vpow.pop %v909
  %v911 = vmul.f32 %v905, 1.442695
  %v912 = vpow.pop %v911
  %v913 = vmul.f32 %v906, 1.442695
  %v914 = vpow.pop %v913
  %915 = vadd.xlane.f32.xlu0 %v908
  %v916 = vpop.xlane.xlu0 %915
  %917 = vadd.xlane.f32.xlu0 %v910
  %v918 = vpop.xlane.xlu0 %917
  %919 = vadd.xlane.f32.xlu0 %v912
  %v920 = vpop.xlane.xlu0 %919
  %921 = vadd.xlane.f32.xlu0 %v914
  %v922 = vpop.xlane.xlu0 %921
  %v923 = vlog2.pop %v916
  %v924 = vmul.f32 %v923, 0.6931472
  %v925 = vlog2.pop %v918
  %v926 = vmul.f32 %v925, 0.6931472
  %v927 = vlog2.pop %v920
  %v928 = vmul.f32 %v927, 0.6931472
  %v929 = vlog2.pop %v922
  %v930 = vmul.f32 %v929, 0.6931472
  %v931 = vsub.f32 %v903, %v924
  %v932 = vsub.f32 %v904, %v926
  %v933 = vsub.f32 %v905, %v928
  %v934 = vsub.f32 %v906, %v930
  %v935 = vpack.c.bf16 %v932, %v931
  %v936 = vpack.c.bf16 %v934, %v933
  %v939 = vunpack.c.l.b16 %v935
  %v940 = vunpack.c.h.b16 %v935
  %v941 = vunpack.c.l.b16 %v936
  %v942 = vunpack.c.h.b16 %v936
  %v943 = vpack.c.b16 %v939, %v939
  %v944 = vpack.c.b16 %v940, %v940
  %v945 = vpack.c.b16 %v941, %v941
  %v946 = vpack.c.b16 %v942, %v942
  %951 = vst [vmem:[%s7] sm:$0xf] %v943
  %952 = vst [vmem:[%s7 + $0x4] sm:$0xf] %v944
  %953 = vst [vmem:[%s7 + $0x8] sm:$0xf] %v945
  %954 = vst [vmem:[%s7 + $0xc] sm:$0xf] %v946
  // Predicated region
  $region30: #{neural_net_ab_forward.1} parent=0 // pred_check
    _
  $region31: #{neural_net_ab_forward.1} parent=0 // pred_check_branch
    %956 = sbr.rel (0) target = $region33
  $region32: #{neural_net_ab_forward.1} parent=0 // pred_region
    _
  $region33: #{neural_net_ab_forward.1} parent=0 // pred_fallthru
    _
  // Predicated region
  $region34: #{neural_net_ab_forward.1} parent=0 // pred_check
    _
  $region35: #{neural_net_ab_forward.1} parent=0 // pred_check_branch
    %958 = sbr.rel (0) target = $region37
  $region36: #{neural_net_ab_forward.1} parent=0 // pred_region
    _
  $region37: #{neural_net_ab_forward.1} parent=0 // pred_fallthru
    _

</llo_original>
